<compile_context>
chip_gen: v5e
topology: v5e:2x2
jax: 0.10.0
libtpu: 0.0.40
codegen_flags: <defaults>
</compile_context>

<pallas_src>
import jax
import jax.numpy as jnp
from jax.experimental import pallas as pl
from jax.experimental.pallas import tpu as pltpu


def _linproj_kernel(x_ref, w_ref, b_ref, o_ref, acc_ref):
    # x_ref:  (1, C, tp, D)  activation tile in the original (B, C, P, D) layout
    # w_ref:  (C, D, tn)     resident, pre-reshaped weight slab
    # b_ref:  (1, tn)        resident bias row
    # o_ref:  (1, tp, tn)    output tile (true d_model width, no lane padding)
    # acc_ref:(tp, tn) f32   VMEM scratch accumulator
    C = x_ref.shape[1]
    acc_ref[...] = jnp.dot(x_ref[0, 0], w_ref[0],
                           preferred_element_type=jnp.float32)
    for c in range(1, C):  # C is small & static -> unrolled, one live accumulator
        acc_ref[...] += jnp.dot(x_ref[0, c], w_ref[c],
                                preferred_element_type=jnp.float32)
    o_ref[0] = (acc_ref[...] + b_ref[...]).astype(o_ref.dtype)


def _round_up(a, b):
    return -(-a // b) * b


def _tile_vmem_bytes(rows, cols, itemsize):
    """VMEM bytes of a (rows, cols) tile after Mosaic sublane/lane padding."""
    sublane = 8 * max(1, 4 // itemsize)          # f32: 8, bf16: 16, int8: 32
    return (_round_up(max(rows, 1), sublane)
            * _round_up(max(cols, 1), 128) * itemsize)


def _vmem_capacity_bytes():
    try:
        return int(pltpu.get_tpu_info().vmem_capacity_bytes)
    except Exception:
        return 64 * 1024 * 1024   # conservative default = v7x per-core VMEM


def _choose_n_tile(N, max_n_tile=512):
    # Lane-dense N tiles (multiple of 128) only when d_model is large; otherwise
    # keep the whole d_model in one block (last dim == full array dim is legal).
    if N > max_n_tile and N % 128 == 0:
        return max_n_tile
    return N


def _choose_patch_tile(P, C, D, tn, x_item, w_item, out_item, budget_bytes,
                       max_patch_tile=1024):
    """Largest multiple-of-8 patch tile whose (padded) working set fits budget."""
    # Conservative: assume double-buffered weight/bias (the fallback path) so
    # both the Buffered(1) and the fallback configuration fit the budget.
    fixed = (2 * C * _tile_vmem_bytes(D, tn, w_item)      # weight slabs
             + 2 * _tile_vmem_bytes(1, tn, 4)             # bias row
             + (1 << 20))                                 # compiler scratch slack

    def need(tp):
        return (2 * C * _tile_vmem_bytes(tp, D, x_item)   # x tiles (double-buffered)
                + 2 * _tile_vmem_bytes(tp, tn, out_item)  # out tiles (double-buffered)
                + _tile_vmem_bytes(tp, tn, 4))            # f32 accumulator scratch

    tp = min(_round_up(P, 8), _round_up(max_patch_tile, 8))
    while tp > 8 and fixed + need(tp) > budget_bytes:
        tp -= 8
    return tp, fixed + need(tp)


def linear_projection_pallas(x, weight, bias, *, d_model,
                             max_patch_tile=1024, max_n_tile=512):
    """x: (B, channels, patch_num, dct) or (channels, patch_num, dct);
       weight: (d_model, channels*dct); bias: (d_model,)."""
    squeeze_batch = (x.ndim == 3)
    if squeeze_batch:            # PyTorch unbatched path permute(1,0,2) == B=1
        x = x[None]
    B, C, P, D = x.shape
    N = d_model
    assert weight.shape == (N, C * D)
    assert bias.shape == (N,)

    # One-time tiny weight re-layout: (N, C*D) -> (C, D, N), so the kernel does
    # plain row-major (tp, D) @ (D, tn) matmuls with zero in-kernel transposes.
    w_cdn = jnp.transpose(weight.reshape(N, C, D), (1, 2, 0))
    b_row = bias.reshape(1, N)

    # ---------------- tiling (generation-aware) ----------------
    tn = _choose_n_tile(N, max_n_tile)
    cap = _vmem_capacity_bytes()
    budget = int(0.70 * cap)
    tp, vmem_need = _choose_patch_tile(
        P, C, D, tn, x.dtype.itemsize, w_cdn.dtype.itemsize, x.dtype.itemsize,
        budget, max_patch_tile)

    n_steps = pl.cdiv(N, tn)
    p_steps = pl.cdiv(P, tp)
    # v7x shards "parallel" grid axes over 2 TensorCores: make sure the grid
    # has at least 2 steps so one core is never idle.
    if B * n_steps * p_steps < 2 and P > 8:
        tp = min(tp, _round_up(-(-P // 2), 8))
        p_steps = pl.cdiv(P, tp)

    grid = (B, n_steps, p_steps)

    vmem_limit = int(min(max(32 * 1024 * 1024, int(1.5 * vmem_need) + (2 << 20)),
                         int(0.92 * cap)))

    out_shape = jax.ShapeDtypeStruct((B, P, N), x.dtype)
    compiler_params = pltpu.CompilerParams(
        dimension_semantics=("parallel", "parallel", "parallel"),
        vmem_limit_bytes=vmem_limit)

    def build(single_buffer_residents):
        # Weight/bias are grid-invariant along the inner axes -> single-buffer
        # them to halve their VMEM footprint (no traffic change).
        resident_kwargs = (
            dict(pipeline_mode=pl.Buffered(1)) if single_buffer_residents else {})
        in_specs = [
            pl.BlockSpec((1, C, tp, D), lambda b, n, p: (b, 0, p, 0)),
            pl.BlockSpec((C, D, tn), lambda b, n, p: (0, 0, n), **resident_kwargs),
            pl.BlockSpec((1, tn), lambda b, n, p: (0, n), **resident_kwargs),
        ]
        out_specs = pl.BlockSpec((1, tp, tn), lambda b, n, p: (b, p, n))
        return pl.pallas_call(
            _linproj_kernel,
            out_shape=out_shape,
            grid=grid,
            in_specs=in_specs,
            out_specs=out_specs,
            scratch_shapes=[pltpu.VMEM((tp, tn), jnp.float32)],
            compiler_params=compiler_params,
        )

    try:
        out = build(True)(x, w_cdn, b_row)
    except Exception:
        # Fallback for JAX builds where BlockSpec.pipeline_mode is unsupported.
        out = build(False)(x, w_cdn, b_row)

    if squeeze_batch:
        out = out[0]
    return out


if __name__ == "__main__":
    # Module hyperparameters (small, consistent with the forward pass).
    ac = 7                  # -> dct = ac + 1 = 8
    channels = 4
    patch_num = 16
    d_model = 32
    batch = 2
    dct = ac + 1
    in_features = dct * channels  # 32

    key = jax.random.PRNGKey(0)
    kx, kw, kb = jax.random.split(key, 3)

    # nn.Linear parameters: weight (d_model, in_features), bias (d_model,)
    weight = jax.random.normal(kw, (d_model, in_features), dtype=jnp.float32) * 0.05
    bias = jax.random.normal(kb, (d_model,), dtype=jnp.float32) * 0.05

    # Input in PyTorch layout (B, channels, patch_num, dct)
    x = jax.random.normal(kx, (batch, channels, patch_num, dct), dtype=jnp.float32)

    # Batched path.
    out = linear_projection_pallas(x, weight, bias, d_model=d_model)
    out = jax.block_until_ready(out)

    ref = jnp.einsum(
        "bpk,ok->bpo",
        jnp.transpose(x, (0, 2, 1, 3)).reshape(batch, patch_num, in_features),
        weight,
    ) + bias
    assert out.shape == (batch, patch_num, d_model)
    assert jnp.allclose(out, ref, atol=1e-5, rtol=1e-5)

    # Unbatched path (PyTorch permute(1,0,2)); also exercises the megacore
    # tp-cap so the (B=1) grid still has >= 2 parallel steps.
    x1 = x[0]
    out1 = jax.block_until_ready(
        linear_projection_pallas(x1, weight, bias, d_model=d_model))
    ref1 = (jnp.transpose(x1, (1, 0, 2)).reshape(patch_num, in_features)
            @ weight.T + bias)
    assert out1.shape == (patch_num, d_model)
    assert jnp.allclose(out1, ref1, atol=1e-5, rtol=1e-5)

    print("KERNEL_OK")
</pallas_src>

<mosaic_0001>
module attributes {stable_mosaic.version = 11 : i64} {
  func.func @_linproj_kernel(%arg0: i32, %arg1: i32, %arg2: i32, %arg3: memref<1x4x16x8xf32, #tpu.memory_space<vmem>>, %arg4: memref<4x8x32xf32, #tpu.memory_space<vmem>>, %arg5: memref<1x32xf32, #tpu.memory_space<vmem>>, %arg6: memref<1x16x32xf32, #tpu.memory_space<vmem>>, %arg7: memref<16x32xf32, #tpu.memory_space<vmem>>) attributes {dimension_semantics = [#tpu.dimension_semantics<parallel>, #tpu.dimension_semantics<parallel>, #tpu.dimension_semantics<parallel>], iteration_bounds = array<i64: 2, 1, 1>, scalar_prefetch = 0 : i64, scratch_operands = 1 : i64, tpu.core_type = #tpu.core_type<tc>, window_params = [{transform_indices = @transform_0, window_bounds = array<i64: 1, 4, 16, 8>}, {pipeline_mode = #tpu.pipeline_mode<synchronous>, transform_indices = @transform_1, window_bounds = array<i64: 4, 8, 32>}, {pipeline_mode = #tpu.pipeline_mode<synchronous>, transform_indices = @transform_2, window_bounds = array<i64: 1, 32>}, {transform_indices = @transform_3, window_bounds = array<i64: 1, 16, 32>}]} {
    %c0 = arith.constant 0 : index
    %c0_0 = arith.constant 0 : index
    %c0_1 = arith.constant 0 : index
    %c0_2 = arith.constant 0 : index
    %0 = vector.load %arg3[%c0, %c0_0, %c0_1, %c0_2] : memref<1x4x16x8xf32, #tpu.memory_space<vmem>>, vector<1x1x16x8xf32>
    %1 = vector.shape_cast %0 : vector<1x1x16x8xf32> to vector<16x8xf32>
    %c0_3 = arith.constant 0 : index
    %c0_4 = arith.constant 0 : index
    %c0_5 = arith.constant 0 : index
    %2 = vector.load %arg4[%c0_3, %c0_4, %c0_5] : memref<4x8x32xf32, #tpu.memory_space<vmem>>, vector<1x8x32xf32>
    %3 = vector.shape_cast %2 : vector<1x8x32xf32> to vector<8x32xf32>
    %cst = arith.constant dense<0.000000e+00> : vector<16x32xf32>
    %4 = tpu.matmul %1, %3, %cst {dimension_numbers = #tpu.dot_dimension_numbers<[1], [0], [0], [1], [0, 0, 1, 1], [], []>} : vector<16x8xf32>, vector<8x32xf32>, vector<16x32xf32> -> vector<16x32xf32>
    %c0_6 = arith.constant 0 : index
    %c0_7 = arith.constant 0 : index
    %5 = vector.load %arg7[%c0_6, %c0_7] : memref<16x32xf32, #tpu.memory_space<vmem>>, vector<16x32xf32>
    tpu.vector_store %arg7[%c0_6, %c0_7], %4 {strides = array<i32>} : memref<16x32xf32, #tpu.memory_space<vmem>>, vector<16x32xf32>,
    %c0_8 = arith.constant 0 : index
    %c0_9 = arith.constant 0 : index
    %6 = vector.load %arg7[%c0_8, %c0_9] : memref<16x32xf32, #tpu.memory_space<vmem>>, vector<16x32xf32>
    %c0_10 = arith.constant 0 : index
    %c1 = arith.constant 1 : index
    %c0_11 = arith.constant 0 : index
    %c0_12 = arith.constant 0 : index
    %7 = vector.load %arg3[%c0_10, %c1, %c0_11, %c0_12] : memref<1x4x16x8xf32, #tpu.memory_space<vmem>>, vector<1x1x16x8xf32>
    %8 = vector.shape_cast %7 : vector<1x1x16x8xf32> to vector<16x8xf32>
    %c1_13 = arith.constant 1 : index
    %c0_14 = arith.constant 0 : index
    %c0_15 = arith.constant 0 : index
    %9 = vector.load %arg4[%c1_13, %c0_14, %c0_15] : memref<4x8x32xf32, #tpu.memory_space<vmem>>, vector<1x8x32xf32>
    %10 = vector.shape_cast %9 : vector<1x8x32xf32> to vector<8x32xf32>
    %cst_16 = arith.constant dense<0.000000e+00> : vector<16x32xf32>
    %11 = tpu.matmul %8, %10, %cst_16 {dimension_numbers = #tpu.dot_dimension_numbers<[1], [0], [0], [1], [0, 0, 1, 1], [], []>} : vector<16x8xf32>, vector<8x32xf32>, vector<16x32xf32> -> vector<16x32xf32>
    %12 = arith.addf %6, %11 : vector<16x32xf32>
    %c0_17 = arith.constant 0 : index
    %c0_18 = arith.constant 0 : index
    %13 = vector.load %arg7[%c0_17, %c0_18] : memref<16x32xf32, #tpu.memory_space<vmem>>, vector<16x32xf32>
    tpu.vector_store %arg7[%c0_17, %c0_18], %12 {strides = array<i32>} : memref<16x32xf32, #tpu.memory_space<vmem>>, vector<16x32xf32>,
    %c0_19 = arith.constant 0 : index
    %c0_20 = arith.constant 0 : index
    %14 = vector.load %arg7[%c0_19, %c0_20] : memref<16x32xf32, #tpu.memory_space<vmem>>, vector<16x32xf32>
    %c0_21 = arith.constant 0 : index
    %c2 = arith.constant 2 : index
    %c0_22 = arith.constant 0 : index
    %c0_23 = arith.constant 0 : index
    %15 = vector.load %arg3[%c0_21, %c2, %c0_22, %c0_23] : memref<1x4x16x8xf32, #tpu.memory_space<vmem>>, vector<1x1x16x8xf32>
    %16 = vector.shape_cast %15 : vector<1x1x16x8xf32> to vector<16x8xf32>
    %c2_24 = arith.constant 2 : index
    %c0_25 = arith.constant 0 : index
    %c0_26 = arith.constant 0 : index
    %17 = vector.load %arg4[%c2_24, %c0_25, %c0_26] : memref<4x8x32xf32, #tpu.memory_space<vmem>>, vector<1x8x32xf32>
    %18 = vector.shape_cast %17 : vector<1x8x32xf32> to vector<8x32xf32>
    %cst_27 = arith.constant dense<0.000000e+00> : vector<16x32xf32>
    %19 = tpu.matmul %16, %18, %cst_27 {dimension_numbers = #tpu.dot_dimension_numbers<[1], [0], [0], [1], [0, 0, 1, 1], [], []>} : vector<16x8xf32>, vector<8x32xf32>, vector<16x32xf32> -> vector<16x32xf32>
    %20 = arith.addf %14, %19 : vector<16x32xf32>
    %c0_28 = arith.constant 0 : index
    %c0_29 = arith.constant 0 : index
    %21 = vector.load %arg7[%c0_28, %c0_29] : memref<16x32xf32, #tpu.memory_space<vmem>>, vector<16x32xf32>
    tpu.vector_store %arg7[%c0_28, %c0_29], %20 {strides = array<i32>} : memref<16x32xf32, #tpu.memory_space<vmem>>, vector<16x32xf32>,
    %c0_30 = arith.constant 0 : index
    %c0_31 = arith.constant 0 : index
    %22 = vector.load %arg7[%c0_30, %c0_31] : memref<16x32xf32, #tpu.memory_space<vmem>>, vector<16x32xf32>
    %c0_32 = arith.constant 0 : index
    %c3 = arith.constant 3 : index
    %c0_33 = arith.constant 0 : index
    %c0_34 = arith.constant 0 : index
    %23 = vector.load %arg3[%c0_32, %c3, %c0_33, %c0_34] : memref<1x4x16x8xf32, #tpu.memory_space<vmem>>, vector<1x1x16x8xf32>
    %24 = vector.shape_cast %23 : vector<1x1x16x8xf32> to vector<16x8xf32>
    %c3_35 = arith.constant 3 : index
    %c0_36 = arith.constant 0 : index
    %c0_37 = arith.constant 0 : index
    %25 = vector.load %arg4[%c3_35, %c0_36, %c0_37] : memref<4x8x32xf32, #tpu.memory_space<vmem>>, vector<1x8x32xf32>
    %26 = vector.shape_cast %25 : vector<1x8x32xf32> to vector<8x32xf32>
    %cst_38 = arith.constant dense<0.000000e+00> : vector<16x32xf32>
    %27 = tpu.matmul %24, %26, %cst_38 {dimension_numbers = #tpu.dot_dimension_numbers<[1], [0], [0], [1], [0, 0, 1, 1], [], []>} : vector<16x8xf32>, vector<8x32xf32>, vector<16x32xf32> -> vector<16x32xf32>
    %28 = arith.addf %22, %27 : vector<16x32xf32>
    %c0_39 = arith.constant 0 : index
    %c0_40 = arith.constant 0 : index
    %29 = vector.load %arg7[%c0_39, %c0_40] : memref<16x32xf32, #tpu.memory_space<vmem>>, vector<16x32xf32>
    tpu.vector_store %arg7[%c0_39, %c0_40], %28 {strides = array<i32>} : memref<16x32xf32, #tpu.memory_space<vmem>>, vector<16x32xf32>,
    %c0_41 = arith.constant 0 : index
    %c0_42 = arith.constant 0 : index
    %30 = vector.load %arg7[%c0_41, %c0_42] : memref<16x32xf32, #tpu.memory_space<vmem>>, vector<16x32xf32>
    %c0_43 = arith.constant 0 : index
    %c0_44 = arith.constant 0 : index
    %31 = vector.load %arg5[%c0_43, %c0_44] : memref<1x32xf32, #tpu.memory_space<vmem>>, vector<1x32xf32>
    %32 = vector.broadcast %31 : vector<1x32xf32> to vector<16x32xf32>
    %33 = arith.addf %30, %32 : vector<16x32xf32>
    %c0_45 = arith.constant 0 : index
    %c0_46 = arith.constant 0 : index
    %c0_47 = arith.constant 0 : index
    %34 = vector.load %arg6[%c0_45, %c0_46, %c0_47] : memref<1x16x32xf32, #tpu.memory_space<vmem>>, vector<1x16x32xf32>
    %35 = vector.shape_cast %34 : vector<1x16x32xf32> to vector<16x32xf32>
    %36 = vector.shape_cast %33 : vector<16x32xf32> to vector<1x16x32xf32>
    tpu.vector_store %arg6[%c0_45, %c0_46, %c0_47], %36 {strides = array<i32>} : memref<1x16x32xf32, #tpu.memory_space<vmem>>, vector<1x16x32xf32>,
    return
  }
  func.func @transform_0(%arg0: i32, %arg1: i32, %arg2: i32) -> (i32, i32, i32, i32) {
    %c0_i32 = arith.constant 0 : i32
    %c0_i32_0 = arith.constant 0 : i32
    %c0_i32_1 = arith.constant 0 : i32
    return %arg0, %c0_i32, %arg2, %c0_i32_0 : i32, i32, i32, i32
  }
  func.func @transform_1(%arg0: i32, %arg1: i32, %arg2: i32) -> (i32, i32, i32) {
    %c0_i32 = arith.constant 0 : i32
    %c0_i32_0 = arith.constant 0 : i32
    %c0_i32_1 = arith.constant 0 : i32
    return %c0_i32, %c0_i32_0, %arg1 : i32, i32, i32
  }
  func.func @transform_2(%arg0: i32, %arg1: i32, %arg2: i32) -> (i32, i32) {
    %c0_i32 = arith.constant 0 : i32
    %c0_i32_0 = arith.constant 0 : i32
    return %c0_i32, %arg1 : i32, i32
  }
  func.func @transform_3(%arg0: i32, %arg1: i32, %arg2: i32) -> (i32, i32, i32) {
    %c0_i32 = arith.constant 0 : i32
    return %arg0, %arg2, %arg1 : i32, i32, i32
  }
}

module attributes {stable_mosaic.version = 11 : i64} {
  func.func @_linproj_kernel(%arg0: i32, %arg1: i32, %arg2: i32, %arg3: memref<1x4x16x8xf32, #tpu.memory_space<vmem>>, %arg4: memref<4x8x32xf32, #tpu.memory_space<vmem>>, %arg5: memref<1x32xf32, #tpu.memory_space<vmem>>, %arg6: memref<1x16x32xf32, #tpu.memory_space<vmem>>, %arg7: memref<16x32xf32, #tpu.memory_space<vmem>>) attributes {dimension_semantics = [#tpu.dimension_semantics<parallel>, #tpu.dimension_semantics<parallel>, #tpu.dimension_semantics<parallel>], iteration_bounds = array<i64: 2, 1, 1>, scalar_prefetch = 0 : i64, scratch_operands = 1 : i64, tpu.core_type = #tpu.core_type<tc>, window_params = [{transform_indices = @transform_0, window_bounds = array<i64: 1, 4, 16, 8>}, {transform_indices = @transform_1, window_bounds = array<i64: 4, 8, 32>}, {transform_indices = @transform_2, window_bounds = array<i64: 1, 32>}, {transform_indices = @transform_3, window_bounds = array<i64: 1, 16, 32>}]} {
    %c0 = arith.constant 0 : index
    %c0_0 = arith.constant 0 : index
    %c0_1 = arith.constant 0 : index
    %c0_2 = arith.constant 0 : index
    %0 = vector.load %arg3[%c0, %c0_0, %c0_1, %c0_2] : memref<1x4x16x8xf32, #tpu.memory_space<vmem>>, vector<1x1x16x8xf32>
    %1 = vector.shape_cast %0 : vector<1x1x16x8xf32> to vector<16x8xf32>
    %c0_3 = arith.constant 0 : index
    %c0_4 = arith.constant 0 : index
    %c0_5 = arith.constant 0 : index
    %2 = vector.load %arg4[%c0_3, %c0_4, %c0_5] : memref<4x8x32xf32, #tpu.memory_space<vmem>>, vector<1x8x32xf32>
    %3 = vector.shape_cast %2 : vector<1x8x32xf32> to vector<8x32xf32>
    %cst = arith.constant dense<0.000000e+00> : vector<16x32xf32>
    %4 = tpu.matmul %1, %3, %cst {dimension_numbers = #tpu.dot_dimension_numbers<[1], [0], [0], [1], [0, 0, 1, 1], [], []>} : vector<16x8xf32>, vector<8x32xf32>, vector<16x32xf32> -> vector<16x32xf32>
    %c0_6 = arith.constant 0 : index
    %c0_7 = arith.constant 0 : index
    %5 = vector.load %arg7[%c0_6, %c0_7] : memref<16x32xf32, #tpu.memory_space<vmem>>, vector<16x32xf32>
    tpu.vector_store %arg7[%c0_6, %c0_7], %4 {strides = array<i32>} : memref<16x32xf32, #tpu.memory_space<vmem>>, vector<16x32xf32>,
    %c0_8 = arith.constant 0 : index
    %c0_9 = arith.constant 0 : index
    %6 = vector.load %arg7[%c0_8, %c0_9] : memref<16x32xf32, #tpu.memory_space<vmem>>, vector<16x32xf32>
    %c0_10 = arith.constant 0 : index
    %c1 = arith.constant 1 : index
    %c0_11 = arith.constant 0 : index
    %c0_12 = arith.constant 0 : index
    %7 = vector.load %arg3[%c0_10, %c1, %c0_11, %c0_12] : memref<1x4x16x8xf32, #tpu.memory_space<vmem>>, vector<1x1x16x8xf32>
    %8 = vector.shape_cast %7 : vector<1x1x16x8xf32> to vector<16x8xf32>
    %c1_13 = arith.constant 1 : index
    %c0_14 = arith.constant 0 : index
    %c0_15 = arith.constant 0 : index
    %9 = vector.load %arg4[%c1_13, %c0_14, %c0_15] : memref<4x8x32xf32, #tpu.memory_space<vmem>>, vector<1x8x32xf32>
    %10 = vector.shape_cast %9 : vector<1x8x32xf32> to vector<8x32xf32>
    %cst_16 = arith.constant dense<0.000000e+00> : vector<16x32xf32>
    %11 = tpu.matmul %8, %10, %cst_16 {dimension_numbers = #tpu.dot_dimension_numbers<[1], [0], [0], [1], [0, 0, 1, 1], [], []>} : vector<16x8xf32>, vector<8x32xf32>, vector<16x32xf32> -> vector<16x32xf32>
    %12 = arith.addf %6, %11 : vector<16x32xf32>
    %c0_17 = arith.constant 0 : index
    %c0_18 = arith.constant 0 : index
    %13 = vector.load %arg7[%c0_17, %c0_18] : memref<16x32xf32, #tpu.memory_space<vmem>>, vector<16x32xf32>
    tpu.vector_store %arg7[%c0_17, %c0_18], %12 {strides = array<i32>} : memref<16x32xf32, #tpu.memory_space<vmem>>, vector<16x32xf32>,
    %c0_19 = arith.constant 0 : index
    %c0_20 = arith.constant 0 : index
    %14 = vector.load %arg7[%c0_19, %c0_20] : memref<16x32xf32, #tpu.memory_space<vmem>>, vector<16x32xf32>
    %c0_21 = arith.constant 0 : index
    %c2 = arith.constant 2 : index
    %c0_22 = arith.constant 0 : index
    %c0_23 = arith.constant 0 : index
    %15 = vector.load %arg3[%c0_21, %c2, %c0_22, %c0_23] : memref<1x4x16x8xf32, #tpu.memory_space<vmem>>, vector<1x1x16x8xf32>
    %16 = vector.shape_cast %15 : vector<1x1x16x8xf32> to vector<16x8xf32>
    %c2_24 = arith.constant 2 : index
    %c0_25 = arith.constant 0 : index
    %c0_26 = arith.constant 0 : index
    %17 = vector.load %arg4[%c2_24, %c0_25, %c0_26] : memref<4x8x32xf32, #tpu.memory_space<vmem>>, vector<1x8x32xf32>
    %18 = vector.shape_cast %17 : vector<1x8x32xf32> to vector<8x32xf32>
    %cst_27 = arith.constant dense<0.000000e+00> : vector<16x32xf32>
    %19 = tpu.matmul %16, %18, %cst_27 {dimension_numbers = #tpu.dot_dimension_numbers<[1], [0], [0], [1], [0, 0, 1, 1], [], []>} : vector<16x8xf32>, vector<8x32xf32>, vector<16x32xf32> -> vector<16x32xf32>
    %20 = arith.addf %14, %19 : vector<16x32xf32>
    %c0_28 = arith.constant 0 : index
    %c0_29 = arith.constant 0 : index
    %21 = vector.load %arg7[%c0_28, %c0_29] : memref<16x32xf32, #tpu.memory_space<vmem>>, vector<16x32xf32>
    tpu.vector_store %arg7[%c0_28, %c0_29], %20 {strides = array<i32>} : memref<16x32xf32, #tpu.memory_space<vmem>>, vector<16x32xf32>,
    %c0_30 = arith.constant 0 : index
    %c0_31 = arith.constant 0 : index
    %22 = vector.load %arg7[%c0_30, %c0_31] : memref<16x32xf32, #tpu.memory_space<vmem>>, vector<16x32xf32>
    %c0_32 = arith.constant 0 : index
    %c3 = arith.constant 3 : index
    %c0_33 = arith.constant 0 : index
    %c0_34 = arith.constant 0 : index
    %23 = vector.load %arg3[%c0_32, %c3, %c0_33, %c0_34] : memref<1x4x16x8xf32, #tpu.memory_space<vmem>>, vector<1x1x16x8xf32>
    %24 = vector.shape_cast %23 : vector<1x1x16x8xf32> to vector<16x8xf32>
    %c3_35 = arith.constant 3 : index
    %c0_36 = arith.constant 0 : index
    %c0_37 = arith.constant 0 : index
    %25 = vector.load %arg4[%c3_35, %c0_36, %c0_37] : memref<4x8x32xf32, #tpu.memory_space<vmem>>, vector<1x8x32xf32>
    %26 = vector.shape_cast %25 : vector<1x8x32xf32> to vector<8x32xf32>
    %cst_38 = arith.constant dense<0.000000e+00> : vector<16x32xf32>
    %27 = tpu.matmul %24, %26, %cst_38 {dimension_numbers = #tpu.dot_dimension_numbers<[1], [0], [0], [1], [0, 0, 1, 1], [], []>} : vector<16x8xf32>, vector<8x32xf32>, vector<16x32xf32> -> vector<16x32xf32>
    %28 = arith.addf %22, %27 : vector<16x32xf32>
    %c0_39 = arith.constant 0 : index
    %c0_40 = arith.constant 0 : index
    %29 = vector.load %arg7[%c0_39, %c0_40] : memref<16x32xf32, #tpu.memory_space<vmem>>, vector<16x32xf32>
    tpu.vector_store %arg7[%c0_39, %c0_40], %28 {strides = array<i32>} : memref<16x32xf32, #tpu.memory_space<vmem>>, vector<16x32xf32>,
    %c0_41 = arith.constant 0 : index
    %c0_42 = arith.constant 0 : index
    %30 = vector.load %arg7[%c0_41, %c0_42] : memref<16x32xf32, #tpu.memory_space<vmem>>, vector<16x32xf32>
    %c0_43 = arith.constant 0 : index
    %c0_44 = arith.constant 0 : index
    %31 = vector.load %arg5[%c0_43, %c0_44] : memref<1x32xf32, #tpu.memory_space<vmem>>, vector<1x32xf32>
    %32 = vector.broadcast %31 : vector<1x32xf32> to vector<16x32xf32>
    %33 = arith.addf %30, %32 : vector<16x32xf32>
    %c0_45 = arith.constant 0 : index
    %c0_46 = arith.constant 0 : index
    %c0_47 = arith.constant 0 : index
    %34 = vector.load %arg6[%c0_45, %c0_46, %c0_47] : memref<1x16x32xf32, #tpu.memory_space<vmem>>, vector<1x16x32xf32>
    %35 = vector.shape_cast %34 : vector<1x16x32xf32> to vector<16x32xf32>
    %36 = vector.shape_cast %33 : vector<16x32xf32> to vector<1x16x32xf32>
    tpu.vector_store %arg6[%c0_45, %c0_46, %c0_47], %36 {strides = array<i32>} : memref<1x16x32xf32, #tpu.memory_space<vmem>>, vector<1x16x32xf32>,
    return
  }
  func.func @transform_0(%arg0: i32, %arg1: i32, %arg2: i32) -> (i32, i32, i32, i32) {
    %c0_i32 = arith.constant 0 : i32
    %c0_i32_0 = arith.constant 0 : i32
    %c0_i32_1 = arith.constant 0 : i32
    return %arg0, %c0_i32, %arg2, %c0_i32_0 : i32, i32, i32, i32
  }
  func.func @transform_1(%arg0: i32, %arg1: i32, %arg2: i32) -> (i32, i32, i32) {
    %c0_i32 = arith.constant 0 : i32
    %c0_i32_0 = arith.constant 0 : i32
    %c0_i32_1 = arith.constant 0 : i32
    return %c0_i32, %c0_i32_0, %arg1 : i32, i32, i32
  }
  func.func @transform_2(%arg0: i32, %arg1: i32, %arg2: i32) -> (i32, i32) {
    %c0_i32 = arith.constant 0 : i32
    %c0_i32_0 = arith.constant 0 : i32
    return %c0_i32, %arg1 : i32, i32
  }
  func.func @transform_3(%arg0: i32, %arg1: i32, %arg2: i32) -> (i32, i32, i32) {
    %c0_i32 = arith.constant 0 : i32
    return %arg0, %arg2, %arg1 : i32, i32, i32
  }
}

</mosaic_0001>

<llo_original>
// kernel: tpu_custom_call.1
$region0: #{tpu_custom_call.1}
  #allocation0 [shape = 'u32[]', space=smem, size = 0x4, offset = 0x4, fixed_abs, tag = 'smem constant byte address 0x4 - core index']
  #allocation1 [shape = 'u32[72,128]{1,0:T(1,128)}', space=vmem, size = 0x9000, scoped, tag = 'internal scratch']
  #allocation2 [shape = 'f32[16,32]{1,0:T(8,128)}', space=vmem, size = 0x2000, scoped, tag = 'scratch operand']
  %s0 = inlined_call_operand.vmem [shape: f32[2,4,16,8], index: 0, kind: input, shape index: {}]
  %s1 = inlined_call_operand.vmem [shape: f32[4,8,32], index: 1, kind: input, shape index: {}]
  %s2 = inlined_call_operand.vmem [shape: f32[1,32], index: 2, kind: input, shape index: {}]
  %s3 = inlined_call_operand.hbm [shape: f32[2,16,32], index: 3, kind: output, shape index: {}]
  %s4 = sld [smem:[#allocation0]]
  $region45: #{tpu_custom_call.1} parent=0
    _
  %s6 = ssub.s32 1, %s4
  %s7 = scalar_select 0, %s6, %s4
  $region1: #{tpu_custom_call.1} parent=0
    #allocation3 [shape = 'u8[16384]{0}', space=vmem, size = 0x4000, scoped, tag = 'output window, operand 0']
    #allocation4 [shape = 's32[2]{0}', space=sflag, size = 0x8, scoped, tag = 'scoped memory for tpu_custom_call.1']
    %8 = vsyncpa [#allocation4], 0
    %s9 = scalar_lea.sflag [#allocation4], 1
    %10 = vsyncpa %s9, 0
    loop: start=0, step=1, limit=4
    $region2: #{tpu_custom_call.1} parent=1 // loop_pre_header
      _
    $region3: #{tpu_custom_call.1} parent=1 // loop_header
      %s12 = sphi 0, %s16
      %p13 = scmp.ge.s32.totalorder %s12, 4
      %s19 = sphi 0, %s38
      %s20 = sphi 0, %s34
      %s21 = sphi 0, %s30
      %s22 = sphi 0, %s19
      %s23 = sphi 0, %s20
      %s24 = sphi 0, %s21
      %s25 = sphi 0, %s22
      %s26 = sphi 0, %s23
      %s27 = sphi 0, %s24
      %s43 = sphi 0, %s45
      %s46 = sphi 0, %s43
      %s47 = sphi 0, %s46
      %s63 = sphi 0, %s47
      %s69 = sphi 0, %s71
      %s72 = sphi 0, %s69
      %s73 = sphi 0, %s72
      %s89 = sphi 0, %s73
      %s95 = sphi 0, %s97
      %s98 = sphi 0, %s95
      %s99 = sphi 0, %s98
      %s115 = sphi 0, %s99
      %s125 = sphi 0, %s127
      %s128 = sphi 0, %s125
      %s129 = sphi 0, %s128
      %s145 = sphi 0, %s129
    $region4: #{tpu_custom_call.1} parent=1 // loop_header_branch
      %15 = sbr.rel (%p13) target = $region8
    $region5: #{tpu_custom_call.1} parent=1 // loop_body
      %s17 = ssub.s32 %s12, 1
      %s18 = ssub.s32 %s12, 2
      %s28 = sadd.s32 1, %s21
      %p29 = scmp.ge.s32.totalorder %s28, 1
      %s30 = scalar_select %p29, 0, %s28
      %s31 = sadd.s32 1, %s20
      %s32 = scalar_select %p29, %s31, %s20
      %p33 = scmp.ge.s32.totalorder %s32, 1
      %s34 = scalar_select %p33, 0, %s32
      %s35 = sadd.s32 1, %s19
      %s36 = scalar_select %p33, %s35, %s19
      %p37 = scmp.ge.s32.totalorder %s36, 2
      %s38 = scalar_select %p37, 0, %s36
      %s39 = ssub.s32 %s19, %s38
      %s40 = ssub.s32 %s21, %s30
      %s41 = sor.u32 %s39, %s40
      %p42 = scmp.eq.s32.totalorder %s41, 0
      %s44 = sadd.s32 %s43, 1
      %s45 = scalar_select %p42, %s43, %s44
      %p48 = pneg %p42
      %p49 = scmp.eq.s32.totalorder %s12, 1
      %p50 = por %p48, %p49
      %p51 = scmp.ne.s32.totalorder %s43, %s46
      %p52 = scmp.eq.s32.totalorder %s12, 0
      %p53 = por %p51, %p52
      %p54 = scmp.ne.s32.totalorder %s43, %s46
      %p55 = scmp.eq.s32.totalorder %s17, 1
      %p56 = por %p54, %p55
      %p57 = scmp.ne.s32.totalorder %s46, %s47
      %p58 = scmp.eq.s32.totalorder %s17, 0
      %p59 = por %p57, %p58
      %p60 = scmp.ne.s32.totalorder %s46, %s47
      %p61 = scmp.eq.s32.totalorder %s18, 1
      %p62 = por %p60, %p61
      %p64 = scmp.ne.s32.totalorder %s47, %s63
      %p65 = scmp.eq.s32.totalorder %s18, 0
      %p66 = por %p64, %p65
      %s67 = ssub.s32 %s20, %s34
      %p68 = scmp.eq.s32.totalorder %s67, 0
      %s70 = sadd.s32 %s69, 1
      %s71 = scalar_select %p68, %s69, %s70
      %p74 = pneg %p68
      %p75 = scmp.eq.s32.totalorder %s12, 1
      %p76 = por %p74, %p75
      %p77 = scmp.ne.s32.totalorder %s69, %s72
      %p78 = scmp.eq.s32.totalorder %s12, 0
      %p79 = por %p77, %p78
      %p80 = scmp.ne.s32.totalorder %s69, %s72
      %p81 = scmp.eq.s32.totalorder %s17, 1
      %p82 = por %p80, %p81
      %p83 = scmp.ne.s32.totalorder %s72, %s73
      %p84 = scmp.eq.s32.totalorder %s17, 0
      %p85 = por %p83, %p84
      %p86 = scmp.ne.s32.totalorder %s72, %s73
      %p87 = scmp.eq.s32.totalorder %s18, 1
      %p88 = por %p86, %p87
      %p90 = scmp.ne.s32.totalorder %s73, %s89
      %p91 = scmp.eq.s32.totalorder %s18, 0
      %p92 = por %p90, %p91
      %s93 = ssub.s32 %s20, %s34
      %p94 = scmp.eq.s32.totalorder %s93, 0
      %s96 = sadd.s32 %s95, 1
      %s97 = scalar_select %p94, %s95, %s96
      %p100 = pneg %p94
      %p101 = scmp.eq.s32.totalorder %s12, 1
      %p102 = por %p100, %p101
      %p103 = scmp.ne.s32.totalorder %s95, %s98
      %p104 = scmp.eq.s32.totalorder %s12, 0
      %p105 = por %p103, %p104
      %p106 = scmp.ne.s32.totalorder %s95, %s98
      %p107 = scmp.eq.s32.totalorder %s17, 1
      %p108 = por %p106, %p107
      %p109 = scmp.ne.s32.totalorder %s98, %s99
      %p110 = scmp.eq.s32.totalorder %s17, 0
      %p111 = por %p109, %p110
      %p112 = scmp.ne.s32.totalorder %s98, %s99
      %p113 = scmp.eq.s32.totalorder %s18, 1
      %p114 = por %p112, %p113
      %p116 = scmp.ne.s32.totalorder %s99, %s115
      %p117 = scmp.eq.s32.totalorder %s18, 0
      %p118 = por %p116, %p117
      %s119 = ssub.s32 %s19, %s38
      %s120 = ssub.s32 %s21, %s30
      %s121 = sor.u32 %s119, %s120
      %s122 = ssub.s32 %s20, %s34
      %s123 = sor.u32 %s121, %s122
      %p124 = scmp.eq.s32.totalorder %s123, 0
      %s126 = sadd.s32 %s125, 1
      %s127 = scalar_select %p124, %s125, %s126
      %p130 = pneg %p124
      %p131 = scmp.eq.s32.totalorder %s12, 1
      %p132 = por %p130, %p131
      %p133 = scmp.ne.s32.totalorder %s125, %s128
      %p134 = scmp.eq.s32.totalorder %s12, 0
      %p135 = por %p133, %p134
      %p136 = scmp.ne.s32.totalorder %s125, %s128
      %p137 = scmp.eq.s32.totalorder %s17, 1
      %p138 = por %p136, %p137
      %p139 = scmp.ne.s32.totalorder %s128, %s129
      %p140 = scmp.eq.s32.totalorder %s17, 0
      %p141 = por %p139, %p140
      %p142 = scmp.ne.s32.totalorder %s128, %s129
      %p143 = scmp.eq.s32.totalorder %s18, 1
      %p144 = por %p142, %p143
      %p146 = scmp.ne.s32.totalorder %s129, %s145
      %p147 = scmp.eq.s32.totalorder %s18, 0
      %p148 = por %p146, %p147
      %p149 = scmp.le.s32.totalorder 1, %s12
      %p150 = scmp.lt.s32.totalorder %s12, 3
      %p151 = pnand %p149, %p150
      %p152 = pneg %p151
      // Predicated region
      $region9: #{tpu_custom_call.1} parent=5 // pred_check
        _
      $region10: #{tpu_custom_call.1} parent=5 // pred_check_branch
        %154 = sbr.rel (%p151) target = $region12
      $region11: #{tpu_custom_call.1} parent=5 // pred_region
        %s155 = ssub.s32 %s12, 1
        // Predicated region
        $region13: #{tpu_custom_call.1} parent=11 // pred_check
          %p156 = pneg %p85
        $region14: #{tpu_custom_call.1} parent=11 // pred_check_branch
          %158 = sbr.rel (%p156) target = $region16
        $region15: #{tpu_custom_call.1} parent=11 // pred_region
          %p159 = scmp.lt.s32.totalorder %s23, 0
          %s160 = scalar_select %p159, %s23, 0
          %s161 = smul.addr %s160, 8
          %s162 = scalar_lea.vmem %s1, %s161
        $region16: #{tpu_custom_call.1} parent=11 // pred_fallthru
          _
        // Predicated region
        $region17: #{tpu_custom_call.1} parent=11 // pred_check
          %p163 = pneg %p111
        $region18: #{tpu_custom_call.1} parent=11 // pred_check_branch
          %165 = sbr.rel (%p163) target = $region20
        $region19: #{tpu_custom_call.1} parent=11 // pred_region
          %p166 = scmp.lt.s32.totalorder %s23, 0
          %s167 = scalar_select %p166, %s23, 0
          %s168 = scalar_lea.vmem %s2, %s167
        $region20: #{tpu_custom_call.1} parent=11 // pred_fallthru
          _
      $region12: #{tpu_custom_call.1} parent=5 // pred_fallthru
        _
      %p169 = scmp.lt.s32.totalorder %s12, 2
      // Predicated region
      $region21: #{tpu_custom_call.1} parent=5 // pred_check
        %p170 = pneg %p169
      $region22: #{tpu_custom_call.1} parent=5 // pred_check_branch
        %172 = sbr.rel (%p170) target = $region24
      $region23: #{tpu_custom_call.1} parent=5 // pred_region
        // Predicated region
        $region25: #{tpu_custom_call.1} parent=23 // pred_check
          %p173 = pneg %p53
        $region26: #{tpu_custom_call.1} parent=23 // pred_check_branch
          %175 = sbr.rel (%p173) target = $region28
        $region27: #{tpu_custom_call.1} parent=23 // pred_region
          %s176 = smul.u32 2, %s21
          %p177 = scmp.lt.s32.totalorder %s19, 1
          %s178 = scalar_select %p177, %s19, 1
          %p179 = scmp.lt.s32.totalorder %s176, 1
          %s180 = scalar_select %p179, %s176, 1
          %s181 = smul.addr %s178, 8
          %s182 = sadd.s32 %s180, %s181
          %s183 = smul.addr %s182, 8
          %s184 = scalar_lea.vmem %s0, %s183
          %s185 = smul.u32 2, %s21
        $region28: #{tpu_custom_call.1} parent=23 // pred_fallthru
          _
      $region24: #{tpu_custom_call.1} parent=5 // pred_fallthru
        _
      %p186 = scmp.le.s32.totalorder 1, %s12
      %p187 = scmp.lt.s32.totalorder %s12, 3
      %p188 = pnand %p186, %p187
      %p189 = pneg %p188
      // Predicated region
      $region29: #{tpu_custom_call.1} parent=5 // pred_check
        _
      $region30: #{tpu_custom_call.1} parent=5 // pred_check_branch
        %191 = sbr.rel (%p188) target = $region32
      $region31: #{tpu_custom_call.1} parent=5 // pred_region
        %s192 = ssub.s32 %s12, 1
        %s193 = smul.u32 2, %s24
        %p194 = scmp.lt.s32.totalorder %s22, 1
        %s195 = scalar_select %p194, %s22, 1
        %p196 = scmp.lt.s32.totalorder %s193, 1
        %s197 = scalar_select %p196, %s193, 1
        %s198 = smul.addr %s195, 8
        %s199 = sadd.s32 %s197, %s198
        %s200 = smul.addr %s199, 8
        %s201 = scalar_lea.vmem %s0, %s200
        %p202 = pneg %p59
        %p203 = pneg %p56
        %p204 = scmp.lt.s32.totalorder %s23, 0
        %s205 = scalar_select %p204, %s23, 0
        %s206 = smul.addr %s205, 8
        %s207 = scalar_lea.vmem %s1, %s206
        %p208 = pneg %p85
        %p209 = pneg %p82
        %p210 = scmp.lt.s32.totalorder %s23, 0
        %s211 = scalar_select %p210, %s23, 0
        %s212 = scalar_lea.vmem %s2, %s211
        %p213 = pneg %p111
        %p214 = pneg %p108
        %p215 = pneg %p141
        %p216 = pneg %p138
        %s217 = sand.u32 %s128, 1
        %s218 = scalar_lea.sflag [#allocation4], %s217
        %s219 = sand.u32 %s128, 1
        %s220 = smul.addr %s219, 16
        %s221 = scalar_lea.vmem [#allocation3], %s220
        %s222 = smul.u32 2, %s24
        %p223 = scmp.lt.s32.totalorder %s22, 1
        %s224 = scalar_select %p223, %s22, 1
        %p225 = scmp.lt.s32.totalorder %s222, 1
        %s226 = scalar_select %p225, %s222, 1
        %s227 = smul.addr %s224, 8
        %s228 = sadd.s32 %s226, %s227
        %s229 = smul.addr %s228, 8
        %s230 = scalar_lea.vmem %s0, %s229
        %s231 = smul.u32 2, %s24
        %p232 = scmp.lt.s32.totalorder %s23, 0
        %s233 = scalar_select %p232, %s23, 0
        %s234 = smul.addr %s233, 8
        %s235 = scalar_lea.vmem %s1, %s234
        %p236 = scmp.lt.s32.totalorder %s23, 0
        %s237 = scalar_select %p236, %s23, 0
        %s238 = scalar_lea.vmem %s2, %s237
        %s239 = smul.u32 2, %s24
        %v240 = vld [vmem:[%s230] sm:$0xff]
        %v241 = vld [vmem:[%s230 + $0x8] sm:$0xff]
        %v242 = vld [vmem:[%s235] sm:$0xff]
        %vm243 = vcmask 64512
        %v245 = vsel %vm243, %v240, 0
        %v248 = vsel %vm243, %v241, 0
        %250 = vmatpush.msra.mxu0 0.0
        %251 = vmatpush.msra.mxu0 0.0
        %252 = vmatpush.msra.mxu0 0.0
        %253 = vmatpush.msra.mxu0 0.0
        %254 = vmatpush.msra.mxu0 0.0
        %255 = vmatpush.msra.mxu0 0.0
        %256 = vmatpush.msra.mxu0 0.0
        %257 = vmatpush.msra.mxu0 0.0
        %258 = vmatpush.msra.mxu0 0.0
        %259 = vmatpush.msra.mxu0 0.0
        %260 = vmatpush.msra.mxu0 0.0
        %261 = vmatpush.msra.mxu0 0.0
        %262 = vmatpush.msra.mxu0 0.0
        %263 = vmatpush.msra.mxu0 0.0
        %264 = vmatpush.msra.mxu0 0.0
        %265 = vmatpush.msra.mxu0 %v242
        %266 = vmatmul.f32.gmra.mxu0 %v245
        %v267 = vpop.f32.mrf.mxu0
        %v268 = vadd.f32 0.0, %v267
        %269 = vmatmul.f32.gmra.mxu0 %v248
        %v270 = vpop.f32.mrf.mxu0
        %v271 = vadd.f32 0.0, %v270
        %272 = vdwg.mxu0
        %vm273 = vcmask 261120
        %274 = vst.msk [vmem:[#allocation2] sm:$0xff] %vm273, %v268
        %275 = vst.msk [vmem:[#allocation2 + $0x8] sm:$0xff] %vm273, %v271
        %v276 = vld [vmem:[#allocation2] sm:$0xff]
        %v277 = vld [vmem:[#allocation2 + $0x8] sm:$0xff]
        %s278 = scalar_lea.vmem %s230, 16
        %v279 = vld [vmem:[%s278] sm:$0xff]
        %v280 = vld [vmem:[%s278 + $0x8] sm:$0xff]
        %s281 = scalar_lea.vmem %s235, 8
        %v282 = vld [vmem:[%s281] sm:$0xff]
        %v284 = vsel %vm243, %v279, 0
        %v287 = vsel %vm243, %v280, 0
        %289 = vmatpush.msra.mxu0 0.0
        %290 = vmatpush.msra.mxu0 0.0
        %291 = vmatpush.msra.mxu0 0.0
        %292 = vmatpush.msra.mxu0 0.0
        %293 = vmatpush.msra.mxu0 0.0
        %294 = vmatpush.msra.mxu0 0.0
        %295 = vmatpush.msra.mxu0 0.0
        %296 = vmatpush.msra.mxu0 0.0
        %297 = vmatpush.msra.mxu0 0.0
        %298 = vmatpush.msra.mxu0 0.0
        %299 = vmatpush.msra.mxu0 0.0
        %300 = vmatpush.msra.mxu0 0.0
        %301 = vmatpush.msra.mxu0 0.0
        %302 = vmatpush.msra.mxu0 0.0
        %303 = vmatpush.msra.mxu0 0.0
        %304 = vmatpush.msra.mxu0 %v282
        %305 = vmatmul.f32.gmra.mxu0 %v284
        %v306 = vpop.f32.mrf.mxu0
        %v307 = vadd.f32 0.0, %v306
        %308 = vmatmul.f32.gmra.mxu0 %v287
        %v309 = vpop.f32.mrf.mxu0
        %v310 = vadd.f32 0.0, %v309
        %311 = vdwg.mxu0
        %v312 = vadd.f32 %v276, %v307
        %v313 = vadd.f32 %v277, %v310
        %314 = vst.msk [vmem:[#allocation2] sm:$0xff] %vm273, %v312
        %315 = vst.msk [vmem:[#allocation2 + $0x8] sm:$0xff] %vm273, %v313
        %v316 = vld [vmem:[#allocation2] sm:$0xff]
        %v317 = vld [vmem:[#allocation2 + $0x8] sm:$0xff]
        %s318 = scalar_lea.vmem %s230, 32
        %v319 = vld [vmem:[%s318] sm:$0xff]
        %v320 = vld [vmem:[%s318 + $0x8] sm:$0xff]
        %s321 = scalar_lea.vmem %s235, 16
        %v322 = vld [vmem:[%s321] sm:$0xff]
        %v324 = vsel %vm243, %v319, 0
        %v327 = vsel %vm243, %v320, 0
        %329 = vmatpush.msra.mxu0 0.0
        %330 = vmatpush.msra.mxu0 0.0
        %331 = vmatpush.msra.mxu0 0.0
        %332 = vmatpush.msra.mxu0 0.0
        %333 = vmatpush.msra.mxu0 0.0
        %334 = vmatpush.msra.mxu0 0.0
        %335 = vmatpush.msra.mxu0 0.0
        %336 = vmatpush.msra.mxu0 0.0
        %337 = vmatpush.msra.mxu0 0.0
        %338 = vmatpush.msra.mxu0 0.0
        %339 = vmatpush.msra.mxu0 0.0
        %340 = vmatpush.msra.mxu0 0.0
        %341 = vmatpush.msra.mxu0 0.0
        %342 = vmatpush.msra.mxu0 0.0
        %343 = vmatpush.msra.mxu0 0.0
        %344 = vmatpush.msra.mxu0 %v322
        %345 = vmatmul.f32.gmra.mxu0 %v324
        %v346 = vpop.f32.mrf.mxu0
        %v347 = vadd.f32 0.0, %v346
        %348 = vmatmul.f32.gmra.mxu0 %v327
        %v349 = vpop.f32.mrf.mxu0
        %v350 = vadd.f32 0.0, %v349
        %351 = vdwg.mxu0
        %v352 = vadd.f32 %v316, %v347
        %v353 = vadd.f32 %v317, %v350
        %354 = vst.msk [vmem:[#allocation2] sm:$0xff] %vm273, %v352
        %355 = vst.msk [vmem:[#allocation2 + $0x8] sm:$0xff] %vm273, %v353
        %v356 = vld [vmem:[#allocation2] sm:$0xff]
        %v357 = vld [vmem:[#allocation2 + $0x8] sm:$0xff]
        %s358 = scalar_lea.vmem %s230, 48
        %v359 = vld [vmem:[%s358] sm:$0xff]
        %v360 = vld [vmem:[%s358 + $0x8] sm:$0xff]
        %s361 = scalar_lea.vmem %s235, 24
        %v362 = vld [vmem:[%s361] sm:$0xff]
        %v364 = vsel %vm243, %v359, 0
        %v367 = vsel %vm243, %v360, 0
        %369 = vmatpush.msra.mxu0 0.0
        %370 = vmatpush.msra.mxu0 0.0
        %371 = vmatpush.msra.mxu0 0.0
        %372 = vmatpush.msra.mxu0 0.0
        %373 = vmatpush.msra.mxu0 0.0
        %374 = vmatpush.msra.mxu0 0.0
        %375 = vmatpush.msra.mxu0 0.0
        %376 = vmatpush.msra.mxu0 0.0
        %377 = vmatpush.msra.mxu0 0.0
        %378 = vmatpush.msra.mxu0 0.0
        %379 = vmatpush.msra.mxu0 0.0
        %380 = vmatpush.msra.mxu0 0.0
        %381 = vmatpush.msra.mxu0 0.0
        %382 = vmatpush.msra.mxu0 0.0
        %383 = vmatpush.msra.mxu0 0.0
        %384 = vmatpush.msra.mxu0 %v362
        %385 = vmatmul.f32.gmra.mxu0 %v364
        %v386 = vpop.f32.mrf.mxu0
        %v387 = vadd.f32 0.0, %v386
        %388 = vmatmul.f32.gmra.mxu0 %v367
        %v389 = vpop.f32.mrf.mxu0
        %v390 = vadd.f32 0.0, %v389
        %391 = vdwg.mxu0
        %v392 = vadd.f32 %v356, %v387
        %v393 = vadd.f32 %v357, %v390
        %394 = vst.msk [vmem:[#allocation2] sm:$0xff] %vm273, %v392
        %395 = vst.msk [vmem:[#allocation2 + $0x8] sm:$0xff] %vm273, %v393
        %v396 = vld [vmem:[#allocation2] sm:$0xff]
        %v397 = vld [vmem:[#allocation2 + $0x8] sm:$0xff]
        %v398 = vld [vmem:[%s238] sm:$0x1]
        %v400 = vperm.slane %v398, 0
        %v402 = vadd.f32 %v396, %v400
        %v403 = vadd.f32 %v397, %v400
        %404 = vst.msk [vmem:[%s221] sm:$0xff] %vm273, %v402
        %405 = vst.msk [vmem:[%s221 + $0x8] sm:$0xff] %vm273, %v403
        %s406 = sand.u32 %s128, 1
        %s407 = scalar_lea.sflag [#allocation4], %s406
        %s408 = sand.u32 %s128, 1
        %s409 = smul.addr %s408, 16
        %s410 = scalar_lea.vmem [#allocation3], %s409
        // Predicated region
        $region33: #{tpu_custom_call.1} parent=31 // pred_check
          %p411 = pneg %p138
        $region34: #{tpu_custom_call.1} parent=31 // pred_check_branch
          %413 = sbr.rel (%p411) target = $region36
        $region35: #{tpu_custom_call.1} parent=31 // pred_region
          %s414 = smul.u32 2, %s24
          %416 = vsyncadd %s407, 0
          %s417 = sadd.s32 %s23, %s414
          %s418 = smul.addr %s22, 2
          %s419 = sadd.s32 %s417, %s418
          %s420 = smul.addr %s419, 8
          %s421 = scalar_lea.hbm %s3, %s420
          %s422 = sshll.u32 %s410, 4
          %s423 = int_to_ptr.vmem [resolvable:$true] %s422
          %s424 = sshll.u32 %s421, 4
          %s425 = int_to_ptr.hbm [resolvable:$true] %s424
          %430 = dma.vmem_to_hbm [thread:$0]  %s423, 256, %s425, %s407, 128, 128, 8
        $region36: #{tpu_custom_call.1} parent=31 // pred_fallthru
          _
      $region32: #{tpu_custom_call.1} parent=5 // pred_fallthru
        _
      %p431 = scmp.le.s32.totalorder 2, %s12
      // Predicated region
      $region37: #{tpu_custom_call.1} parent=5 // pred_check
        %p432 = pneg %p431
      $region38: #{tpu_custom_call.1} parent=5 // pred_check_branch
        %434 = sbr.rel (%p432) target = $region40
      $region39: #{tpu_custom_call.1} parent=5 // pred_region
        %s435 = ssub.s32 %s12, 2
        // Predicated region
        $region41: #{tpu_custom_call.1} parent=39 // pred_check
          %p436 = pneg %p144
        $region42: #{tpu_custom_call.1} parent=39 // pred_check_branch
          %438 = sbr.rel (%p436) target = $region44
        $region43: #{tpu_custom_call.1} parent=39 // pred_region
          %s439 = sand.u32 %s129, 1
          %s440 = scalar_lea.sflag [#allocation4], %s439
          %s441 = sand.u32 %s129, 1
          %s442 = smul.addr %s441, 16
          %s443 = scalar_lea.vmem [#allocation3], %s442
          %445 = dma.done %s440, 256
        $region44: #{tpu_custom_call.1} parent=39 // pred_fallthru
          _
      $region40: #{tpu_custom_call.1} parent=5 // pred_fallthru
        _
    $region6: #{tpu_custom_call.1} parent=1 // loop_footer
      %s16 = sadd.s32 1, %s12
    $region7: #{tpu_custom_call.1} parent=1 // loop_footer_branch
      %11 = sbr.rel target = $region3
    $region8: #{tpu_custom_call.1} parent=1 // loop_exit
      _
    %446 = vsyncpa [#allocation4], 1
    %s447 = scalar_lea.sflag [#allocation4], 1
    %448 = vsyncpa %s447, 1

// kernel: tpu_custom_call.1
$region0: #{tpu_custom_call.1}
  #allocation0 [shape = 'u32[]', space=smem, size = 0x4, offset = 0x4, fixed_abs, tag = 'smem constant byte address 0x4 - core index']
  #allocation1 [shape = 'u32[72,128]{1,0:T(1,128)}', space=vmem, size = 0x9000, scoped, tag = 'internal scratch']
  #allocation2 [shape = 'f32[16,32]{1,0:T(8,128)}', space=vmem, size = 0x2000, scoped, tag = 'scratch operand']
  %s0 = inlined_call_operand.vmem [shape: f32[2,4,16,8], index: 0, kind: input, shape index: {}]
  %s1 = inlined_call_operand.vmem [shape: f32[4,8,32], index: 1, kind: input, shape index: {}]
  %s2 = inlined_call_operand.vmem [shape: f32[1,32], index: 2, kind: input, shape index: {}]
  %s3 = inlined_call_operand.hbm [shape: f32[2,16,32], index: 3, kind: output, shape index: {}]
  %s4 = sld [smem:[#allocation0]]
  $region45: #{tpu_custom_call.1} parent=0
    _
  %s6 = ssub.s32 1, %s4
  %s7 = scalar_select 0, %s6, %s4
  $region1: #{tpu_custom_call.1} parent=0
    #allocation3 [shape = 'u8[16384]{0}', space=vmem, size = 0x4000, scoped, tag = 'output window, operand 0']
    #allocation4 [shape = 's32[2]{0}', space=sflag, size = 0x8, scoped, tag = 'scoped memory for tpu_custom_call.1']
    %8 = vsyncpa [#allocation4], 0
    %s9 = scalar_lea.sflag [#allocation4], 1
    %10 = vsyncpa %s9, 0
    loop: start=0, step=1, limit=4
    $region2: #{tpu_custom_call.1} parent=1 // loop_pre_header
      _
    $region3: #{tpu_custom_call.1} parent=1 // loop_header
      %s12 = sphi 0, %s16
      %p13 = scmp.ge.s32.totalorder %s12, 4
      %s19 = sphi 0, %s38
      %s20 = sphi 0, %s34
      %s21 = sphi 0, %s30
      %s22 = sphi 0, %s19
      %s23 = sphi 0, %s20
      %s24 = sphi 0, %s21
      %s25 = sphi 0, %s22
      %s26 = sphi 0, %s23
      %s27 = sphi 0, %s24
      %s43 = sphi 0, %s45
      %s46 = sphi 0, %s43
      %s47 = sphi 0, %s46
      %s63 = sphi 0, %s47
      %s69 = sphi 0, %s71
      %s72 = sphi 0, %s69
      %s73 = sphi 0, %s72
      %s89 = sphi 0, %s73
      %s95 = sphi 0, %s97
      %s98 = sphi 0, %s95
      %s99 = sphi 0, %s98
      %s115 = sphi 0, %s99
      %s125 = sphi 0, %s127
      %s128 = sphi 0, %s125
      %s129 = sphi 0, %s128
      %s145 = sphi 0, %s129
    $region4: #{tpu_custom_call.1} parent=1 // loop_header_branch
      %15 = sbr.rel (%p13) target = $region8
    $region5: #{tpu_custom_call.1} parent=1 // loop_body
      %s17 = ssub.s32 %s12, 1
      %s18 = ssub.s32 %s12, 2
      %s28 = sadd.s32 1, %s21
      %p29 = scmp.ge.s32.totalorder %s28, 1
      %s30 = scalar_select %p29, 0, %s28
      %s31 = sadd.s32 1, %s20
      %s32 = scalar_select %p29, %s31, %s20
      %p33 = scmp.ge.s32.totalorder %s32, 1
      %s34 = scalar_select %p33, 0, %s32
      %s35 = sadd.s32 1, %s19
      %s36 = scalar_select %p33, %s35, %s19
      %p37 = scmp.ge.s32.totalorder %s36, 2
      %s38 = scalar_select %p37, 0, %s36
      %s39 = ssub.s32 %s19, %s38
      %s40 = ssub.s32 %s21, %s30
      %s41 = sor.u32 %s39, %s40
      %p42 = scmp.eq.s32.totalorder %s41, 0
      %s44 = sadd.s32 %s43, 1
      %s45 = scalar_select %p42, %s43, %s44
      %p48 = pneg %p42
      %p49 = scmp.eq.s32.totalorder %s12, 1
      %p50 = por %p48, %p49
      %p51 = scmp.ne.s32.totalorder %s43, %s46
      %p52 = scmp.eq.s32.totalorder %s12, 0
      %p53 = por %p51, %p52
      %p54 = scmp.ne.s32.totalorder %s43, %s46
      %p55 = scmp.eq.s32.totalorder %s17, 1
      %p56 = por %p54, %p55
      %p57 = scmp.ne.s32.totalorder %s46, %s47
      %p58 = scmp.eq.s32.totalorder %s17, 0
      %p59 = por %p57, %p58
      %p60 = scmp.ne.s32.totalorder %s46, %s47
      %p61 = scmp.eq.s32.totalorder %s18, 1
      %p62 = por %p60, %p61
      %p64 = scmp.ne.s32.totalorder %s47, %s63
      %p65 = scmp.eq.s32.totalorder %s18, 0
      %p66 = por %p64, %p65
      %s67 = ssub.s32 %s20, %s34
      %p68 = scmp.eq.s32.totalorder %s67, 0
      %s70 = sadd.s32 %s69, 1
      %s71 = scalar_select %p68, %s69, %s70
      %p74 = pneg %p68
      %p75 = scmp.eq.s32.totalorder %s12, 1
      %p76 = por %p74, %p75
      %p77 = scmp.ne.s32.totalorder %s69, %s72
      %p78 = scmp.eq.s32.totalorder %s12, 0
      %p79 = por %p77, %p78
      %p80 = scmp.ne.s32.totalorder %s69, %s72
      %p81 = scmp.eq.s32.totalorder %s17, 1
      %p82 = por %p80, %p81
      %p83 = scmp.ne.s32.totalorder %s72, %s73
      %p84 = scmp.eq.s32.totalorder %s17, 0
      %p85 = por %p83, %p84
      %p86 = scmp.ne.s32.totalorder %s72, %s73
      %p87 = scmp.eq.s32.totalorder %s18, 1
      %p88 = por %p86, %p87
      %p90 = scmp.ne.s32.totalorder %s73, %s89
      %p91 = scmp.eq.s32.totalorder %s18, 0
      %p92 = por %p90, %p91
      %s93 = ssub.s32 %s20, %s34
      %p94 = scmp.eq.s32.totalorder %s93, 0
      %s96 = sadd.s32 %s95, 1
      %s97 = scalar_select %p94, %s95, %s96
      %p100 = pneg %p94
      %p101 = scmp.eq.s32.totalorder %s12, 1
      %p102 = por %p100, %p101
      %p103 = scmp.ne.s32.totalorder %s95, %s98
      %p104 = scmp.eq.s32.totalorder %s12, 0
      %p105 = por %p103, %p104
      %p106 = scmp.ne.s32.totalorder %s95, %s98
      %p107 = scmp.eq.s32.totalorder %s17, 1
      %p108 = por %p106, %p107
      %p109 = scmp.ne.s32.totalorder %s98, %s99
      %p110 = scmp.eq.s32.totalorder %s17, 0
      %p111 = por %p109, %p110
      %p112 = scmp.ne.s32.totalorder %s98, %s99
      %p113 = scmp.eq.s32.totalorder %s18, 1
      %p114 = por %p112, %p113
      %p116 = scmp.ne.s32.totalorder %s99, %s115
      %p117 = scmp.eq.s32.totalorder %s18, 0
      %p118 = por %p116, %p117
      %s119 = ssub.s32 %s19, %s38
      %s120 = ssub.s32 %s21, %s30
      %s121 = sor.u32 %s119, %s120
      %s122 = ssub.s32 %s20, %s34
      %s123 = sor.u32 %s121, %s122
      %p124 = scmp.eq.s32.totalorder %s123, 0
      %s126 = sadd.s32 %s125, 1
      %s127 = scalar_select %p124, %s125, %s126
      %p130 = pneg %p124
      %p131 = scmp.eq.s32.totalorder %s12, 1
      %p132 = por %p130, %p131
      %p133 = scmp.ne.s32.totalorder %s125, %s128
      %p134 = scmp.eq.s32.totalorder %s12, 0
      %p135 = por %p133, %p134
      %p136 = scmp.ne.s32.totalorder %s125, %s128
      %p137 = scmp.eq.s32.totalorder %s17, 1
      %p138 = por %p136, %p137
      %p139 = scmp.ne.s32.totalorder %s128, %s129
      %p140 = scmp.eq.s32.totalorder %s17, 0
      %p141 = por %p139, %p140
      %p142 = scmp.ne.s32.totalorder %s128, %s129
      %p143 = scmp.eq.s32.totalorder %s18, 1
      %p144 = por %p142, %p143
      %p146 = scmp.ne.s32.totalorder %s129, %s145
      %p147 = scmp.eq.s32.totalorder %s18, 0
      %p148 = por %p146, %p147
      %p149 = scmp.le.s32.totalorder 1, %s12
      %p150 = scmp.lt.s32.totalorder %s12, 3
      %p151 = pnand %p149, %p150
      %p152 = pneg %p151
      // Predicated region
      $region9: #{tpu_custom_call.1} parent=5 // pred_check
        _
      $region10: #{tpu_custom_call.1} parent=5 // pred_check_branch
        %154 = sbr.rel (%p151) target = $region12
      $region11: #{tpu_custom_call.1} parent=5 // pred_region
        %s155 = ssub.s32 %s12, 1
        // Predicated region
        $region13: #{tpu_custom_call.1} parent=11 // pred_check
          %p156 = pneg %p85
        $region14: #{tpu_custom_call.1} parent=11 // pred_check_branch
          %158 = sbr.rel (%p156) target = $region16
        $region15: #{tpu_custom_call.1} parent=11 // pred_region
          %p159 = scmp.lt.s32.totalorder %s23, 0
          %s160 = scalar_select %p159, %s23, 0
          %s161 = smul.addr %s160, 8
          %s162 = scalar_lea.vmem %s1, %s161
        $region16: #{tpu_custom_call.1} parent=11 // pred_fallthru
          _
        // Predicated region
        $region17: #{tpu_custom_call.1} parent=11 // pred_check
          %p163 = pneg %p111
        $region18: #{tpu_custom_call.1} parent=11 // pred_check_branch
          %165 = sbr.rel (%p163) target = $region20
        $region19: #{tpu_custom_call.1} parent=11 // pred_region
          %p166 = scmp.lt.s32.totalorder %s23, 0
          %s167 = scalar_select %p166, %s23, 0
          %s168 = scalar_lea.vmem %s2, %s167
        $region20: #{tpu_custom_call.1} parent=11 // pred_fallthru
          _
      $region12: #{tpu_custom_call.1} parent=5 // pred_fallthru
        _
      %p169 = scmp.lt.s32.totalorder %s12, 2
      // Predicated region
      $region21: #{tpu_custom_call.1} parent=5 // pred_check
        %p170 = pneg %p169
      $region22: #{tpu_custom_call.1} parent=5 // pred_check_branch
        %172 = sbr.rel (%p170) target = $region24
      $region23: #{tpu_custom_call.1} parent=5 // pred_region
        // Predicated region
        $region25: #{tpu_custom_call.1} parent=23 // pred_check
          %p173 = pneg %p53
        $region26: #{tpu_custom_call.1} parent=23 // pred_check_branch
          %175 = sbr.rel (%p173) target = $region28
        $region27: #{tpu_custom_call.1} parent=23 // pred_region
          %s176 = smul.u32 2, %s21
          %p177 = scmp.lt.s32.totalorder %s19, 1
          %s178 = scalar_select %p177, %s19, 1
          %p179 = scmp.lt.s32.totalorder %s176, 1
          %s180 = scalar_select %p179, %s176, 1
          %s181 = smul.addr %s178, 8
          %s182 = sadd.s32 %s180, %s181
          %s183 = smul.addr %s182, 8
          %s184 = scalar_lea.vmem %s0, %s183
          %s185 = smul.u32 2, %s21
        $region28: #{tpu_custom_call.1} parent=23 // pred_fallthru
          _
      $region24: #{tpu_custom_call.1} parent=5 // pred_fallthru
        _
      %p186 = scmp.le.s32.totalorder 1, %s12
      %p187 = scmp.lt.s32.totalorder %s12, 3
      %p188 = pnand %p186, %p187
      %p189 = pneg %p188
      // Predicated region
      $region29: #{tpu_custom_call.1} parent=5 // pred_check
        _
      $region30: #{tpu_custom_call.1} parent=5 // pred_check_branch
        %191 = sbr.rel (%p188) target = $region32
      $region31: #{tpu_custom_call.1} parent=5 // pred_region
        %s192 = ssub.s32 %s12, 1
        %s193 = smul.u32 2, %s24
        %p194 = scmp.lt.s32.totalorder %s22, 1
        %s195 = scalar_select %p194, %s22, 1
        %p196 = scmp.lt.s32.totalorder %s193, 1
        %s197 = scalar_select %p196, %s193, 1
        %s198 = smul.addr %s195, 8
        %s199 = sadd.s32 %s197, %s198
        %s200 = smul.addr %s199, 8
        %s201 = scalar_lea.vmem %s0, %s200
        %p202 = pneg %p59
        %p203 = pneg %p56
        %p204 = scmp.lt.s32.totalorder %s23, 0
        %s205 = scalar_select %p204, %s23, 0
        %s206 = smul.addr %s205, 8
        %s207 = scalar_lea.vmem %s1, %s206
        %p208 = pneg %p85
        %p209 = pneg %p82
        %p210 = scmp.lt.s32.totalorder %s23, 0
        %s211 = scalar_select %p210, %s23, 0
        %s212 = scalar_lea.vmem %s2, %s211
        %p213 = pneg %p111
        %p214 = pneg %p108
        %p215 = pneg %p141
        %p216 = pneg %p138
        %s217 = sand.u32 %s128, 1
        %s218 = scalar_lea.sflag [#allocation4], %s217
        %s219 = sand.u32 %s128, 1
        %s220 = smul.addr %s219, 16
        %s221 = scalar_lea.vmem [#allocation3], %s220
        %s222 = smul.u32 2, %s24
        %p223 = scmp.lt.s32.totalorder %s22, 1
        %s224 = scalar_select %p223, %s22, 1
        %p225 = scmp.lt.s32.totalorder %s222, 1
        %s226 = scalar_select %p225, %s222, 1
        %s227 = smul.addr %s224, 8
        %s228 = sadd.s32 %s226, %s227
        %s229 = smul.addr %s228, 8
        %s230 = scalar_lea.vmem %s0, %s229
        %s231 = smul.u32 2, %s24
        %p232 = scmp.lt.s32.totalorder %s23, 0
        %s233 = scalar_select %p232, %s23, 0
        %s234 = smul.addr %s233, 8
        %s235 = scalar_lea.vmem %s1, %s234
        %p236 = scmp.lt.s32.totalorder %s23, 0
        %s237 = scalar_select %p236, %s23, 0
        %s238 = scalar_lea.vmem %s2, %s237
        %s239 = smul.u32 2, %s24
        %v240 = vld [vmem:[%s230] sm:$0xff]
        %v241 = vld [vmem:[%s230 + $0x8] sm:$0xff]
        %v242 = vld [vmem:[%s235] sm:$0xff]
        %vm243 = vcmask 64512
        %v245 = vsel %vm243, %v240, 0
        %v248 = vsel %vm243, %v241, 0
        %250 = vmatpush.msra.mxu0 0.0
        %251 = vmatpush.msra.mxu0 0.0
        %252 = vmatpush.msra.mxu0 0.0
        %253 = vmatpush.msra.mxu0 0.0
        %254 = vmatpush.msra.mxu0 0.0
        %255 = vmatpush.msra.mxu0 0.0
        %256 = vmatpush.msra.mxu0 0.0
        %257 = vmatpush.msra.mxu0 0.0
        %258 = vmatpush.msra.mxu0 0.0
        %259 = vmatpush.msra.mxu0 0.0
        %260 = vmatpush.msra.mxu0 0.0
        %261 = vmatpush.msra.mxu0 0.0
        %262 = vmatpush.msra.mxu0 0.0
        %263 = vmatpush.msra.mxu0 0.0
        %264 = vmatpush.msra.mxu0 0.0
        %265 = vmatpush.msra.mxu0 %v242
        %266 = vmatmul.f32.gmra.mxu0 %v245
        %v267 = vpop.f32.mrf.mxu0
        %v268 = vadd.f32 0.0, %v267
        %269 = vmatmul.f32.gmra.mxu0 %v248
        %v270 = vpop.f32.mrf.mxu0
        %v271 = vadd.f32 0.0, %v270
        %272 = vdwg.mxu0
        %vm273 = vcmask 261120
        %274 = vst.msk [vmem:[#allocation2] sm:$0xff] %vm273, %v268
        %275 = vst.msk [vmem:[#allocation2 + $0x8] sm:$0xff] %vm273, %v271
        %v276 = vld [vmem:[#allocation2] sm:$0xff]
        %v277 = vld [vmem:[#allocation2 + $0x8] sm:$0xff]
        %s278 = scalar_lea.vmem %s230, 16
        %v279 = vld [vmem:[%s278] sm:$0xff]
        %v280 = vld [vmem:[%s278 + $0x8] sm:$0xff]
        %s281 = scalar_lea.vmem %s235, 8
        %v282 = vld [vmem:[%s281] sm:$0xff]
        %v284 = vsel %vm243, %v279, 0
        %v287 = vsel %vm243, %v280, 0
        %289 = vmatpush.msra.mxu0 0.0
        %290 = vmatpush.msra.mxu0 0.0
        %291 = vmatpush.msra.mxu0 0.0
        %292 = vmatpush.msra.mxu0 0.0
        %293 = vmatpush.msra.mxu0 0.0
        %294 = vmatpush.msra.mxu0 0.0
        %295 = vmatpush.msra.mxu0 0.0
        %296 = vmatpush.msra.mxu0 0.0
        %297 = vmatpush.msra.mxu0 0.0
        %298 = vmatpush.msra.mxu0 0.0
        %299 = vmatpush.msra.mxu0 0.0
        %300 = vmatpush.msra.mxu0 0.0
        %301 = vmatpush.msra.mxu0 0.0
        %302 = vmatpush.msra.mxu0 0.0
        %303 = vmatpush.msra.mxu0 0.0
        %304 = vmatpush.msra.mxu0 %v282
        %305 = vmatmul.f32.gmra.mxu0 %v284
        %v306 = vpop.f32.mrf.mxu0
        %v307 = vadd.f32 0.0, %v306
        %308 = vmatmul.f32.gmra.mxu0 %v287
        %v309 = vpop.f32.mrf.mxu0
        %v310 = vadd.f32 0.0, %v309
        %311 = vdwg.mxu0
        %v312 = vadd.f32 %v276, %v307
        %v313 = vadd.f32 %v277, %v310
        %314 = vst.msk [vmem:[#allocation2] sm:$0xff] %vm273, %v312
        %315 = vst.msk [vmem:[#allocation2 + $0x8] sm:$0xff] %vm273, %v313
        %v316 = vld [vmem:[#allocation2] sm:$0xff]
        %v317 = vld [vmem:[#allocation2 + $0x8] sm:$0xff]
        %s318 = scalar_lea.vmem %s230, 32
        %v319 = vld [vmem:[%s318] sm:$0xff]
        %v320 = vld [vmem:[%s318 + $0x8] sm:$0xff]
        %s321 = scalar_lea.vmem %s235, 16
        %v322 = vld [vmem:[%s321] sm:$0xff]
        %v324 = vsel %vm243, %v319, 0
        %v327 = vsel %vm243, %v320, 0
        %329 = vmatpush.msra.mxu0 0.0
        %330 = vmatpush.msra.mxu0 0.0
        %331 = vmatpush.msra.mxu0 0.0
        %332 = vmatpush.msra.mxu0 0.0
        %333 = vmatpush.msra.mxu0 0.0
        %334 = vmatpush.msra.mxu0 0.0
        %335 = vmatpush.msra.mxu0 0.0
        %336 = vmatpush.msra.mxu0 0.0
        %337 = vmatpush.msra.mxu0 0.0
        %338 = vmatpush.msra.mxu0 0.0
        %339 = vmatpush.msra.mxu0 0.0
        %340 = vmatpush.msra.mxu0 0.0
        %341 = vmatpush.msra.mxu0 0.0
        %342 = vmatpush.msra.mxu0 0.0
        %343 = vmatpush.msra.mxu0 0.0
        %344 = vmatpush.msra.mxu0 %v322
        %345 = vmatmul.f32.gmra.mxu0 %v324
        %v346 = vpop.f32.mrf.mxu0
        %v347 = vadd.f32 0.0, %v346
        %348 = vmatmul.f32.gmra.mxu0 %v327
        %v349 = vpop.f32.mrf.mxu0
        %v350 = vadd.f32 0.0, %v349
        %351 = vdwg.mxu0
        %v352 = vadd.f32 %v316, %v347
        %v353 = vadd.f32 %v317, %v350
        %354 = vst.msk [vmem:[#allocation2] sm:$0xff] %vm273, %v352
        %355 = vst.msk [vmem:[#allocation2 + $0x8] sm:$0xff] %vm273, %v353
        %v356 = vld [vmem:[#allocation2] sm:$0xff]
        %v357 = vld [vmem:[#allocation2 + $0x8] sm:$0xff]
        %s358 = scalar_lea.vmem %s230, 48
        %v359 = vld [vmem:[%s358] sm:$0xff]
        %v360 = vld [vmem:[%s358 + $0x8] sm:$0xff]
        %s361 = scalar_lea.vmem %s235, 24
        %v362 = vld [vmem:[%s361] sm:$0xff]
        %v364 = vsel %vm243, %v359, 0
        %v367 = vsel %vm243, %v360, 0
        %369 = vmatpush.msra.mxu0 0.0
        %370 = vmatpush.msra.mxu0 0.0
        %371 = vmatpush.msra.mxu0 0.0
        %372 = vmatpush.msra.mxu0 0.0
        %373 = vmatpush.msra.mxu0 0.0
        %374 = vmatpush.msra.mxu0 0.0
        %375 = vmatpush.msra.mxu0 0.0
        %376 = vmatpush.msra.mxu0 0.0
        %377 = vmatpush.msra.mxu0 0.0
        %378 = vmatpush.msra.mxu0 0.0
        %379 = vmatpush.msra.mxu0 0.0
        %380 = vmatpush.msra.mxu0 0.0
        %381 = vmatpush.msra.mxu0 0.0
        %382 = vmatpush.msra.mxu0 0.0
        %383 = vmatpush.msra.mxu0 0.0
        %384 = vmatpush.msra.mxu0 %v362
        %385 = vmatmul.f32.gmra.mxu0 %v364
        %v386 = vpop.f32.mrf.mxu0
        %v387 = vadd.f32 0.0, %v386
        %388 = vmatmul.f32.gmra.mxu0 %v367
        %v389 = vpop.f32.mrf.mxu0
        %v390 = vadd.f32 0.0, %v389
        %391 = vdwg.mxu0
        %v392 = vadd.f32 %v356, %v387
        %v393 = vadd.f32 %v357, %v390
        %394 = vst.msk [vmem:[#allocation2] sm:$0xff] %vm273, %v392
        %395 = vst.msk [vmem:[#allocation2 + $0x8] sm:$0xff] %vm273, %v393
        %v396 = vld [vmem:[#allocation2] sm:$0xff]
        %v397 = vld [vmem:[#allocation2 + $0x8] sm:$0xff]
        %v398 = vld [vmem:[%s238] sm:$0x1]
        %v400 = vperm.slane %v398, 0
        %v402 = vadd.f32 %v396, %v400
        %v403 = vadd.f32 %v397, %v400
        %404 = vst.msk [vmem:[%s221] sm:$0xff] %vm273, %v402
        %405 = vst.msk [vmem:[%s221 + $0x8] sm:$0xff] %vm273, %v403
        %s406 = sand.u32 %s128, 1
        %s407 = scalar_lea.sflag [#allocation4], %s406
        %s408 = sand.u32 %s128, 1
        %s409 = smul.addr %s408, 16
        %s410 = scalar_lea.vmem [#allocation3], %s409
        // Predicated region
        $region33: #{tpu_custom_call.1} parent=31 // pred_check
          %p411 = pneg %p138
        $region34: #{tpu_custom_call.1} parent=31 // pred_check_branch
          %413 = sbr.rel (%p411) target = $region36
        $region35: #{tpu_custom_call.1} parent=31 // pred_region
          %s414 = smul.u32 2, %s24
          %416 = vsyncadd %s407, 0
          %s417 = sadd.s32 %s23, %s414
          %s418 = smul.addr %s22, 2
          %s419 = sadd.s32 %s417, %s418
          %s420 = smul.addr %s419, 8
          %s421 = scalar_lea.hbm %s3, %s420
          %s422 = sshll.u32 %s410, 4
          %s423 = int_to_ptr.vmem [resolvable:$true] %s422
          %s424 = sshll.u32 %s421, 4
          %s425 = int_to_ptr.hbm [resolvable:$true] %s424
          %430 = dma.vmem_to_hbm [thread:$0]  %s423, 256, %s425, %s407, 128, 128, 8
        $region36: #{tpu_custom_call.1} parent=31 // pred_fallthru
          _
      $region32: #{tpu_custom_call.1} parent=5 // pred_fallthru
        _
      %p431 = scmp.le.s32.totalorder 2, %s12
      // Predicated region
      $region37: #{tpu_custom_call.1} parent=5 // pred_check
        %p432 = pneg %p431
      $region38: #{tpu_custom_call.1} parent=5 // pred_check_branch
        %434 = sbr.rel (%p432) target = $region40
      $region39: #{tpu_custom_call.1} parent=5 // pred_region
        %s435 = ssub.s32 %s12, 2
        // Predicated region
        $region41: #{tpu_custom_call.1} parent=39 // pred_check
          %p436 = pneg %p144
        $region42: #{tpu_custom_call.1} parent=39 // pred_check_branch
          %438 = sbr.rel (%p436) target = $region44
        $region43: #{tpu_custom_call.1} parent=39 // pred_region
          %s439 = sand.u32 %s129, 1
          %s440 = scalar_lea.sflag [#allocation4], %s439
          %s441 = sand.u32 %s129, 1
          %s442 = smul.addr %s441, 16
          %s443 = scalar_lea.vmem [#allocation3], %s442
          %445 = dma.done %s440, 256
        $region44: #{tpu_custom_call.1} parent=39 // pred_fallthru
          _
      $region40: #{tpu_custom_call.1} parent=5 // pred_fallthru
        _
    $region6: #{tpu_custom_call.1} parent=1 // loop_footer
      %s16 = sadd.s32 1, %s12
    $region7: #{tpu_custom_call.1} parent=1 // loop_footer_branch
      %11 = sbr.rel target = $region3
    $region8: #{tpu_custom_call.1} parent=1 // loop_exit
      _
    %446 = vsyncpa [#allocation4], 1
    %s447 = scalar_lea.sflag [#allocation4], 1
    %448 = vsyncpa %s447, 1

</llo_original>
